<compile_context>
chip_gen: v7x
topology: tpu7x:2x2x1
jax: 0.10.0
libtpu: 0.0.40
codegen_flags: <defaults>
</compile_context>

<pallas_src>
import functools

import jax
import jax.numpy as jnp
from jax.experimental import pallas as pl
from jax.experimental.pallas import tpu as pltpu


def _round_up(x, m):
    return (x + m - 1) // m * m


def _node_update_kernel_res(x_ref, wt_ref, b_ref, res_ref, o_ref):
    # x_ref:   (tm, in_dim)   node-feature tile
    # wt_ref:  (in_dim, tn)   weight tile (transposed layout, lane-dense out)
    # b_ref:   (1, tn)        bias tile (f32)
    # res_ref: (tm, tn)       residual tile
    # o_ref:   (tm, tn)       output tile
    y = jnp.dot(x_ref[...], wt_ref[...], preferred_element_type=jnp.float32)
    y = y + b_ref[...].astype(jnp.float32)
    y = jnp.maximum(y, 0.0)                      # ReLU
    # dropout (eval mode) == identity
    y = y + res_ref[...].astype(jnp.float32)     # residual add (f32 epilogue)
    o_ref[...] = y.astype(o_ref.dtype)


def _node_update_kernel_nores(x_ref, wt_ref, b_ref, o_ref):
    y = jnp.dot(x_ref[...], wt_ref[...], preferred_element_type=jnp.float32)
    y = y + b_ref[...].astype(jnp.float32)
    y = jnp.maximum(y, 0.0)                      # ReLU, dropout == identity
    o_ref[...] = y.astype(o_ref.dtype)


@functools.partial(jax.jit, static_argnames=("tm", "tn"))
def node_update(x, wt, bias, res=None, *, tm=256, tn=512):
    """Pallas implementation of NodeUpdate.forward (eval mode).

    x:    [N, in_dim]           node features (f32 or bf16)
    wt:   [in_dim, out_dim]     Linear weight, ALREADY transposed from the
                                PyTorch [out_dim, in_dim] layout (do the
                                transpose once outside the hot path).
    bias: [out_dim]             kept in f32 inside the kernel epilogue
    res:  optional [N, out_dim] residual
    returns [N, out_dim] in x.dtype
    """
    N, in_dim = x.shape
    in_dim_w, out_dim = wt.shape
    assert in_dim_w == in_dim
    assert tm % 8 == 0 and tn % 128 == 0

    # ---- tile sizes & padded shapes (lane-dense output, ragged-N safe) ----
    tm_eff = min(tm, _round_up(N, 8))
    n_pad = _round_up(N, tm_eff)

    out_p0 = _round_up(out_dim, 128)
    tn_eff = min(tn, out_p0)
    out_p = _round_up(out_p0, tn_eff)

    def _pad2(a, rows, cols):
        r, c = a.shape
        if r == rows and c == cols:
            return a
        return jnp.pad(a, ((0, rows - r), (0, cols - c)))

    x_p = _pad2(x, n_pad, in_dim)
    wt_p = _pad2(wt, in_dim, out_p)
    b_p = _pad2(bias.astype(jnp.float32).reshape(1, out_dim), 1, out_p)

    grid = (n_pad // tm_eff, out_p // tn_eff)

    x_spec = pl.BlockSpec((tm_eff, in_dim), lambda i, j: (i, 0))
    wt_spec = pl.BlockSpec((in_dim, tn_eff), lambda i, j: (0, j))
    b_spec = pl.BlockSpec((1, tn_eff), lambda i, j: (0, j))
    out_spec = pl.BlockSpec((tm_eff, tn_eff), lambda i, j: (i, j))

    itemsize = x.dtype.itemsize
    has_res = res is not None
    if has_res:
        res_p = _pad2(res, n_pad, out_p)
        kernel = _node_update_kernel_res
        in_specs = [x_spec, wt_spec, b_spec,
                    pl.BlockSpec((tm_eff, tn_eff), lambda i, j: (i, j))]
        operands = (x_p, wt_p, b_p, res_p)
    else:
        kernel = _node_update_kernel_nores
        in_specs = [x_spec, wt_spec, b_spec]
        operands = (x_p, wt_p, b_p)

    bytes_accessed = (n_pad * in_dim + in_dim * out_p + out_p
                      + (n_pad * out_p if has_res else 0)      # residual read
                      + n_pad * out_p) * itemsize               # output write
    cost = pl.CostEstimate(flops=2 * n_pad * in_dim * out_p,
                           transcendentals=0,
                           bytes_accessed=bytes_accessed)

    out_p_arr = pl.pallas_call(
        kernel,
        out_shape=jax.ShapeDtypeStruct((n_pad, out_p), x.dtype),
        grid_spec=pltpu.PrefetchScalarGridSpec(
            num_scalar_prefetch=0,
            grid=grid,
            in_specs=in_specs,
            out_specs=out_spec,
        ),
        compiler_params=pltpu.CompilerParams(
            dimension_semantics=("parallel", "parallel"),
            vmem_limit_bytes=48 * 1024 * 1024,   # safe on v5e/v6e and v7x (64 MiB)
        ),
        cost_estimate=cost,
    )(*operands)

    return out_p_arr[:N, :out_dim]


def _reference(x, weight, bias, res=None):
    y = jnp.maximum(x @ weight.T + bias, 0.0)
    if res is not None:
        y = y + res
    return y


if __name__ == "__main__":
    # Small shapes consistent with the module: N nodes, in_dim -> out_dim.
    N, in_dim, out_dim = 16, 32, 64
    key = jax.random.PRNGKey(0)
    kx, kw, kb, kr = jax.random.split(key, 4)

    # Deterministic parameter init: xavier_uniform for weight (reset_parameters),
    # PyTorch-default uniform(-1/sqrt(in_dim), 1/sqrt(in_dim)) for bias.
    xavier_bound = (6.0 / (in_dim + out_dim)) ** 0.5
    weight = jax.random.uniform(kw, (out_dim, in_dim), jnp.float32,
                                -xavier_bound, xavier_bound)   # PyTorch layout
    bias_bound = 1.0 / (in_dim ** 0.5)
    bias = jax.random.uniform(kb, (out_dim,), jnp.float32, -bias_bound, bias_bound)

    x = jax.random.normal(kx, (N, in_dim), jnp.float32)       # node.data['ppi_out']
    res = jax.random.normal(kr, (N, out_dim), jnp.float32)    # node.data['res']

    # One-time layout prep OUTSIDE the jitted hot path.
    wt = jnp.asarray(weight.T)                                # [in_dim, out_dim]

    # With residual (f32 path).
    out = jax.block_until_ready(node_update(x, wt, bias, res))
    ref = _reference(x, weight, bias, res)
    assert jnp.allclose(out, ref, atol=1e-5, rtol=1e-5), "mismatch (with res)"

    # Without residual ('res' not in node.data) -> no zeros tensor streamed.
    out_nores = jax.block_until_ready(node_update(x, wt, bias, None))
    ref_nores = _reference(x, weight, bias, None)
    assert jnp.allclose(out_nores, ref_nores, atol=1e-5, rtol=1e-5), "mismatch (no res)"

    # Ragged N (not a multiple of 8): exercises the padding / slicing path.
    Nr = 10
    xr, rr = x[:Nr], res[:Nr]
    out_r = jax.block_until_ready(node_update(xr, wt, bias, rr))
    ref_r = _reference(xr, weight, bias, rr)
    assert out_r.shape == (Nr, out_dim)
    assert jnp.allclose(out_r, ref_r, atol=1e-5, rtol=1e-5), "mismatch (ragged N)"

    # bf16 operands (f32 accumulation + f32 epilogue, cast at store).
    out_bf = jax.block_until_ready(
        node_update(x.astype(jnp.bfloat16), wt.astype(jnp.bfloat16), bias,
                    res.astype(jnp.bfloat16)))
    assert jnp.allclose(out_bf.astype(jnp.float32), ref, atol=1e-1, rtol=1e-1), \
        "mismatch (bf16)"

    print("KERNEL_OK")
</pallas_src>

<mosaic_0001>
module attributes {stable_mosaic.version = 11 : i64} {
  func.func @_node_update_kernel_res(%arg0: i32, %arg1: i32, %arg2: memref<16x32xf32, #tpu.memory_space<vmem>>, %arg3: memref<32x128xf32, #tpu.memory_space<vmem>>, %arg4: memref<1x128xf32, #tpu.memory_space<vmem>>, %arg5: memref<16x128xf32, #tpu.memory_space<vmem>>, %arg6: memref<16x128xf32, #tpu.memory_space<vmem>>) attributes {dimension_semantics = [#tpu.dimension_semantics<parallel>, #tpu.dimension_semantics<parallel>], iteration_bounds = array<i64: 1, 1>, scalar_prefetch = 0 : i64, scratch_operands = 0 : i64, tpu.core_type = #tpu.core_type<tc>, window_params = [{transform_indices = @transform_0, window_bounds = array<i64: 16, 32>}, {transform_indices = @transform_1, window_bounds = array<i64: 32, 128>}, {transform_indices = @transform_2, window_bounds = array<i64: 1, 128>}, {transform_indices = @transform_3, window_bounds = array<i64: 16, 128>}, {transform_indices = @transform_4, window_bounds = array<i64: 16, 128>}]} {
    %c0 = arith.constant 0 : index
    %c0_0 = arith.constant 0 : index
    %0 = vector.load %arg2[%c0, %c0_0] : memref<16x32xf32, #tpu.memory_space<vmem>>, vector<16x32xf32>
    %c0_1 = arith.constant 0 : index
    %c0_2 = arith.constant 0 : index
    %1 = vector.load %arg3[%c0_1, %c0_2] : memref<32x128xf32, #tpu.memory_space<vmem>>, vector<32x128xf32>
    %cst = arith.constant dense<0.000000e+00> : vector<16x128xf32>
    %2 = tpu.matmul %0, %1, %cst {dimension_numbers = #tpu.dot_dimension_numbers<[1], [0], [0], [1], [0, 0, 1, 1], [], []>} : vector<16x32xf32>, vector<32x128xf32>, vector<16x128xf32> -> vector<16x128xf32>
    %c0_3 = arith.constant 0 : index
    %c0_4 = arith.constant 0 : index
    %3 = vector.load %arg4[%c0_3, %c0_4] : memref<1x128xf32, #tpu.memory_space<vmem>>, vector<1x128xf32>
    %4 = vector.broadcast %3 : vector<1x128xf32> to vector<16x128xf32>
    %5 = arith.addf %2, %4 : vector<16x128xf32>
    %cst_5 = arith.constant 0.000000e+00 : f32
    %6 = vector.broadcast %cst_5 : f32 to vector<16x128xf32>
    %7 = arith.maximumf %5, %6 : vector<16x128xf32>
    %c0_6 = arith.constant 0 : index
    %c0_7 = arith.constant 0 : index
    %8 = vector.load %arg5[%c0_6, %c0_7] : memref<16x128xf32, #tpu.memory_space<vmem>>, vector<16x128xf32>
    %9 = arith.addf %7, %8 : vector<16x128xf32>
    %c0_8 = arith.constant 0 : index
    %c0_9 = arith.constant 0 : index
    %10 = vector.load %arg6[%c0_8, %c0_9] : memref<16x128xf32, #tpu.memory_space<vmem>>, vector<16x128xf32>
    tpu.vector_store %arg6[%c0_8, %c0_9], %9 {strides = array<i32>} : memref<16x128xf32, #tpu.memory_space<vmem>>, vector<16x128xf32>,
    return
  }
  func.func @transform_0(%arg0: i32, %arg1: i32) -> (i32, i32) {
    %c0_i32 = arith.constant 0 : i32
    %c0_i32_0 = arith.constant 0 : i32
    return %arg0, %c0_i32 : i32, i32
  }
  func.func @transform_1(%arg0: i32, %arg1: i32) -> (i32, i32) {
    %c0_i32 = arith.constant 0 : i32
    %c0_i32_0 = arith.constant 0 : i32
    return %c0_i32, %arg1 : i32, i32
  }
  func.func @transform_2(%arg0: i32, %arg1: i32) -> (i32, i32) {
    %c0_i32 = arith.constant 0 : i32
    %c0_i32_0 = arith.constant 0 : i32
    return %c0_i32, %arg1 : i32, i32
  }
  func.func @transform_3(%arg0: i32, %arg1: i32) -> (i32, i32) {
    %c0_i32 = arith.constant 0 : i32
    return %arg0, %arg1 : i32, i32
  }
  func.func @transform_4(%arg0: i32, %arg1: i32) -> (i32, i32) {
    %c0_i32 = arith.constant 0 : i32
    return %arg0, %arg1 : i32, i32
  }
}

</mosaic_0001>

<llo_original>
// kernel: node_update.1
$region0: #{node_update.1}
  #allocation0 [shape = 'u32[]', space=smem, size = 0x4, offset = 0x4, fixed_abs, tag = 'smem constant byte address 0x4 - core index']
  #allocation1 [shape = 'u32[144,128]{1,0:T(1,128)}', space=vmem, size = 0x12000, scoped, tag = 'internal scratch']
  %s0 = inlined_call_operand.vmem [shape: f32[16,32], index: 0, kind: input, shape index: {}]
  %s1 = inlined_call_operand.vmem [shape: f32[32,128], index: 1, kind: input, shape index: {}]
  %s2 = inlined_call_operand.vmem [shape: f32[1,128], index: 2, kind: input, shape index: {}]
  %s3 = inlined_call_operand.vmem [shape: f32[16,128], index: 3, kind: input, shape index: {}]
  %s4 = inlined_call_operand.hbm [shape: f32[16,128], index: 4, kind: output, shape index: {}]
  %s5 = sld [smem:[#allocation0]]
  $region26: #{node_update.1} parent=0
    _
  %s7 = ssub.s32 1, %s5
  %s8 = scalar_select 0, %s7, %s5
  $region1: #{node_update.1} parent=0
    #allocation2 [shape = 'u8[8192]{0}', space=vmem, size = 0x2000, scoped, tag = 'output window, operand 0, single buffered']
    #allocation3 [shape = 's32[1]{0}', space=sflag, size = 0x4, scoped, tag = 'scoped memory for node_update.1']
    %9 = vsyncpa [#allocation3], 0
    // Predicated region
    $region2: #{node_update.1} parent=1 // pred_check
      _
    $region3: #{node_update.1} parent=1 // pred_check_branch
      %11 = sbr.rel (0) target = $region5
    $region4: #{node_update.1} parent=1 // pred_region
      _
    $region5: #{node_update.1} parent=1 // pred_fallthru
      _
    // Predicated region
    $region6: #{node_update.1} parent=1 // pred_check
      _
    $region7: #{node_update.1} parent=1 // pred_check_branch
      %13 = sbr.rel (0) target = $region9
    $region8: #{node_update.1} parent=1 // pred_region
      _
    $region9: #{node_update.1} parent=1 // pred_fallthru
      _
    // Predicated region
    $region10: #{node_update.1} parent=1 // pred_check
      _
    $region11: #{node_update.1} parent=1 // pred_check_branch
      %15 = sbr.rel (0) target = $region13
    $region12: #{node_update.1} parent=1 // pred_region
      _
    $region13: #{node_update.1} parent=1 // pred_fallthru
      _
    // Predicated region
    $region14: #{node_update.1} parent=1 // pred_check
      _
    $region15: #{node_update.1} parent=1 // pred_check_branch
      %17 = sbr.rel (0) target = $region17
    $region16: #{node_update.1} parent=1 // pred_region
      _
    $region17: #{node_update.1} parent=1 // pred_fallthru
      _
    %v18 = vld [vmem:[%s0] sm:$0xff]
    %v19 = vld [vmem:[%s0 + $0x8] sm:$0xff]
    %v20 = vld [vmem:[%s1] sm:$0xff]
    %v21 = vld [vmem:[%s1 + $0x8] sm:$0xff]
    %v22 = vld [vmem:[%s1 + $0x10] sm:$0xff]
    %v23 = vld [vmem:[%s1 + $0x18] sm:$0xff]
    %v24 = vld [vmem:[%s2] sm:$0x1]
    %v26 = vlaneseq
    %v27 = vshrl.u32 %v26, 7
    %v28 = vsub.s32 0, %v27
    %v29 = vrot.slane %v24, %v28
    %vm31 = vcmask 261120
    %v33 = vsel %vm31, %v18, 0
    %v36 = vsel %vm31, %v19, 0
    %38 = vmatprep.subr.mxu0 0.0
    %39 = vmatpush1.msra.mxu0 %v20
    %40 = vmatprep.subr.mxu0 0.0
    %41 = vmatpush1.msra.mxu0 %v21
    %42 = vmatprep.subr.mxu0 0.0
    %43 = vmatpush1.msra.mxu0 %v22
    %44 = vmatprep.subr.mxu0 0.0
    %45 = vmatpush1.msra.mxu0 %v23
    %46 = vmatprep.subr.mxu0 0.0
    %47 = vmatpush1.msra.mxu0 0.0
    %48 = vmatprep.subr.mxu0 0.0
    %49 = vmatpush1.msra.mxu0 0.0
    %50 = vmatprep.subr.mxu0 0.0
    %51 = vmatpush1.msra.mxu0 0.0
    %52 = vmatprep.subr.mxu0 0.0
    %53 = vmatpush1.msra.mxu0 0.0
    %54 = vmatprep.subr.mxu0 0.0
    %55 = vmatpush1.msra.mxu0 0.0
    %56 = vmatprep.subr.mxu0 0.0
    %57 = vmatpush1.msra.mxu0 0.0
    %58 = vmatprep.subr.mxu0 0.0
    %59 = vmatpush1.msra.mxu0 0.0
    %60 = vmatprep.subr.mxu0 0.0
    %61 = vmatpush1.msra.mxu0 0.0
    %62 = vmatprep.subr.mxu0 0.0
    %63 = vmatpush1.msra.mxu0 0.0
    %64 = vmatprep.subr.mxu0 0.0
    %65 = vmatpush1.msra.mxu0 0.0
    %66 = vmatprep.subr.mxu0 0.0
    %67 = vmatpush1.msra.mxu0 0.0
    %68 = vmatprep.subr.mxu0 0.0
    %69 = vmatpush1.msra.mxu0 0.0
    %70 = vmatprep.subr.mxu0 0.0
    %71 = vmatpush1.msra.mxu0 0.0
    %72 = vmatprep.subr.mxu0 0.0
    %73 = vmatpush1.msra.mxu0 0.0
    %74 = vmatprep.subr.mxu0 0.0
    %75 = vmatpush1.msra.mxu0 0.0
    %76 = vmatprep.subr.mxu0 0.0
    %77 = vmatpush1.msra.mxu0 0.0
    %78 = vmatprep.subr.mxu0 0.0
    %79 = vmatpush1.msra.mxu0 0.0
    %80 = vmatprep.subr.mxu0 0.0
    %81 = vmatpush1.msra.mxu0 0.0
    %82 = vmatprep.subr.mxu0 0.0
    %83 = vmatpush1.msra.mxu0 0.0
    %84 = vmatprep.subr.mxu0 0.0
    %85 = vmatpush1.msra.mxu0 0.0
    %86 = vmatprep.subr.mxu0 0.0
    %87 = vmatpush1.msra.mxu0 0.0
    %88 = vmatprep.subr.mxu0 0.0
    %89 = vmatpush1.msra.mxu0 0.0
    %90 = vmatprep.subr.mxu0 0.0
    %91 = vmatpush1.msra.mxu0 0.0
    %92 = vmatprep.subr.mxu0 0.0
    %93 = vmatpush1.msra.mxu0 0.0
    %94 = vmatprep.subr.mxu0 0.0
    %95 = vmatpush1.msra.mxu0 0.0
    %96 = vmatprep.subr.mxu0 0.0
    %97 = vmatpush1.msra.mxu0 0.0
    %98 = vmatprep.subr.mxu0 0.0
    %99 = vmatpush1.msra.mxu0 0.0
    %100 = vmatprep.subr.mxu0 0.0
    %101 = vmatpush1.msra.mxu0 0.0
    %102 = vmatprep.mubr.f32.mxu0 0.0
    %103 = vmatmul.mubr.f32.gmra.mrb[0].mxu0 %v33
    %v104 = vpop.f32.mrb[0].mxu0
    %v105 = vadd.f32 %v29, %v104
    %v106 = vpop.f32.mrb[0].mxu0
    %107 = vmatprep.mubr.f32.mxu0 0.0
    %108 = vmatmul.mubr.f32.gmra.mrb[0].mxu0 %v36
    %v109 = vpop.f32.mrb[0].mxu0
    %v110 = vadd.f32 %v29, %v109
    %v111 = vpop.f32.mrb[0].mxu0
    %112 = vdwg.mxu0
    %v113 = vmax.f32 %v105, 0.0
    %v114 = vmax.f32 %v110, 0.0
    %v115 = vld [vmem:[%s3] sm:$0xff]
    %v116 = vld [vmem:[%s3 + $0x8] sm:$0xff]
    %v117 = vadd.f32 %v113, %v115
    %v118 = vadd.f32 %v114, %v116
    %119 = vst [vmem:[#allocation2] sm:$0xff] %v117
    %120 = vst [vmem:[#allocation2 + $0x8] sm:$0xff] %v118
    // Predicated region
    $region18: #{node_update.1} parent=1 // pred_check
      _
    $region19: #{node_update.1} parent=1 // pred_check_branch
      %122 = sbr.rel (0) target = $region21
    $region20: #{node_update.1} parent=1 // pred_region
      %s124 = ssub.s32 256, 256
      %125 = vsyncadd [#allocation3], %s124
      %s126 = sshll.u32 [#allocation2], 4
      %s127 = int_to_ptr.vmem [resolvable:$true] %s126
      %132 = dma.vmem_to_hbm [thread:$0]  %s127, 256, %s4, [#allocation3], 128, 128, 8
    $region21: #{node_update.1} parent=1 // pred_fallthru
      _
    // Predicated region
    $region22: #{node_update.1} parent=1 // pred_check
      _
    $region23: #{node_update.1} parent=1 // pred_check_branch
      %134 = sbr.rel (0) target = $region25
    $region24: #{node_update.1} parent=1 // pred_region
      %135 = dma.done [#allocation3], 256
    $region25: #{node_update.1} parent=1 // pred_fallthru
      _
    %136 = vsyncpa [#allocation3], 1

</llo_original>
